<compile_context>
chip_gen: v5e
topology: v5e:2x2
jax: 0.10.0
libtpu: 0.0.40
codegen_flags: <defaults>
</compile_context>

<pallas_src>
import functools

import jax
import jax.numpy as jnp
from jax import lax
from jax.experimental import pallas as pl
from jax.experimental.pallas import tpu as pltpu

_LANES = 128
# 2048 rows * 128 lanes * 4 B = 1 MiB per f32 input tile.
_MAX_BLK_ROWS = 2048


def _ceil_div(a, b):
    return -(-a // b)


def _round_up(a, b):
    return _ceil_div(a, b) * b


def _sublane_mult(dtype):
    # packed sublane granularity: 4-byte -> 8, 2-byte -> 16, 1-byte -> 32
    return {1: 32, 2: 16}.get(jnp.dtype(dtype).itemsize, 8)


def _bce_kernel(p_ref, t_ref, out_ref, *, n, w0, w1, weighted, hard_labels,
                needs_mask):
    p = p_ref[...].astype(jnp.float32)
    t = t_ref[...].astype(jnp.float32)
    rows, lanes = p.shape

    if hard_labels:
        # One EUP log per element. Only valid for hard {0,1} targets.
        p_eff = jnp.where(t > 0.5, p, 1.0 - p)
        if weighted:
            p_eff = jnp.clip(p_eff, 1e-7, 1.0 - 1e-7)
            w_eff = jnp.where(t > 0.5, jnp.float32(w0), jnp.float32(w1))
            bce = -w_eff * jnp.log(p_eff)
        else:
            bce = -jnp.maximum(jnp.log(p_eff), -100.0)
    else:
        if weighted:
            # BCELoss_ClassWeights: clamp inputs, weighted BCE
            pc = jnp.clip(p, 1e-7, 1.0 - 1e-7)
            bce = (-w0 * t * jnp.log(pc)
                   - w1 * (1.0 - t) * jnp.log(1.0 - pc))
        else:
            # torch.nn.BCELoss: clamp log outputs at -100
            log_p = jnp.maximum(jnp.log(p), -100.0)
            log_1mp = jnp.maximum(jnp.log(1.0 - p), -100.0)
            bce = -(t * log_p + (1.0 - t) * log_1mp)

    if needs_mask:
        # Mask padded tail / out-of-bounds rows of a partial last block.
        # Row/col decomposition keeps every index comfortably inside int32.
        pid = pl.program_id(0)
        g_row = pid * rows + lax.broadcasted_iota(jnp.int32, (rows, lanes), 0)
        full_rows = n // lanes
        rem = n % lanes
        if rem:
            col = lax.broadcasted_iota(jnp.int32, (rows, lanes), 1)
            valid = (g_row < full_rows) | ((g_row == full_rows) & (col < rem))
        else:
            valid = g_row < full_rows
        bce = jnp.where(valid, bce, 0.0)

    # Per-(sublane, lane) partial sums: pure vreg adds, no cross-lane reduce,
    # and an aligned, lane-dense (8, 128) store.
    out_ref[...] = jnp.sum(bce.reshape(rows // 8, 8, lanes), axis=0)


@functools.partial(jax.jit, static_argnames=("class_weights", "hard_labels"))
def pallas_binary_cross_entropy(y_pred, y_true, class_weights=None,
                                hard_labels=False):
    """Mean BCE over flattened y_pred/y_true (matches the PyTorch module).

    class_weights: optional (w0, w1) tuple -> BCELoss_ClassWeights path.
    hard_labels:   opt-in single-log fast path; only valid when every target
                   is exactly 0 or 1 (default False keeps exact semantics).
    """
    n = int(y_pred.size)
    p = y_pred.reshape(-1)
    t = y_true.reshape(-1)   # kept in the producer's dtype (fewer HBM bytes)

    sub = max(_sublane_mult(p.dtype), _sublane_mult(t.dtype))
    rows = _ceil_div(n, _LANES)

    if n % _LANES == 0 and rows >= sub:
        # Zero-copy: row-major reshape is a bitcast, no extra HBM round trip.
        arr_rows = rows
        p2 = p.reshape(arr_rows, _LANES)
        t2 = t.reshape(arr_rows, _LANES)
    else:
        # Ragged / tiny inputs only: pad the small tail (masked in-kernel).
        arr_rows = max(_round_up(rows, sub), sub)
        pad = arr_rows * _LANES - n
        p2 = jnp.pad(p, (0, pad)).reshape(arr_rows, _LANES)
        t2 = jnp.pad(t, (0, pad)).reshape(arr_rows, _LANES)

    blk_rows = min(_MAX_BLK_ROWS, (arr_rows // sub) * sub)
    # Keep >=2 tiles whenever rows allow so the "parallel" grid axis can be
    # sharded over both v7x TensorCores (no-op on single-TC v5e/v6e).
    if arr_rows >= 2 * sub and _ceil_div(arr_rows, blk_rows) < 2:
        blk_rows = _round_up(_ceil_div(arr_rows, 2), sub)
    num_tiles = _ceil_div(arr_rows, blk_rows)

    # Mask only when the last block is partial or the input was padded.
    needs_mask = (arr_rows % blk_rows != 0) or (n != arr_rows * _LANES)

    weighted = class_weights is not None
    w0, w1 = ((float(class_weights[0]), float(class_weights[1]))
              if weighted else (1.0, 1.0))

    kernel = functools.partial(
        _bce_kernel, n=n, w0=w0, w1=w1, weighted=weighted,
        hard_labels=bool(hard_labels), needs_mask=needs_mask)

    bytes_in = n * (jnp.dtype(p.dtype).itemsize + jnp.dtype(t.dtype).itemsize)
    partials = pl.pallas_call(
        kernel,
        out_shape=jax.ShapeDtypeStruct((num_tiles, 8, _LANES), jnp.float32),
        grid=(num_tiles,),
        in_specs=[
            pl.BlockSpec((blk_rows, _LANES), lambda i: (i, 0)),
            pl.BlockSpec((blk_rows, _LANES), lambda i: (i, 0)),
        ],
        out_specs=pl.BlockSpec((None, 8, _LANES), lambda i: (i, 0, 0)),
        compiler_params=pltpu.CompilerParams(
            dimension_semantics=("parallel",),
            # 48 MiB << physical VMEM on v5e/v6e (128 MiB) and v7x (64 MiB);
            # guards against v5e's 16 MiB default scoped limit with 1 MiB tiles.
            vmem_limit_bytes=48 * 1024 * 1024),
        cost_estimate=pl.CostEstimate(
            flops=8 * n,
            transcendentals=(1 if hard_labels else 2) * n,
            bytes_accessed=bytes_in + num_tiles * 8 * _LANES * 4),
    )(p2, t2)

    # Mean over the flattened vector (== bce.mean() / bce.mean(axis=0)).
    return jnp.sum(partials) / n


class BinaryCrossEntropy:
    """Mirror of the PyTorch module; forward(y_pred, y_true) -> scalar loss."""

    def __init__(self, class_weights=None, hard_labels=False):
        self.class_weights = (None if class_weights is None
                              else tuple(float(w) for w in class_weights))
        self.hard_labels = bool(hard_labels)

    def forward(self, y_pred, y_true):
        return pallas_binary_cross_entropy(y_pred, y_true,
                                           class_weights=self.class_weights,
                                           hard_labels=self.hard_labels)

    __call__ = forward

    def reset(self):
        pass


# ----------------------------- pure-JAX references -----------------------------
def _ref_unweighted(y_pred, y_true):
    p = y_pred.reshape(-1).astype(jnp.float32)
    t = y_true.reshape(-1).astype(jnp.float32)
    log_p = jnp.maximum(jnp.log(p), -100.0)
    log_1mp = jnp.maximum(jnp.log(1.0 - p), -100.0)
    return jnp.mean(-(t * log_p + (1.0 - t) * log_1mp))


def _ref_weighted(y_pred, y_true, class_weights):
    w0, w1 = class_weights
    p = jnp.clip(y_pred.reshape(-1).astype(jnp.float32), 1e-7, 1.0 - 1e-7)
    t = y_true.reshape(-1).astype(jnp.float32)
    bce = -w0 * t * jnp.log(p) - w1 * (1.0 - t) * jnp.log(1.0 - p)
    return jnp.mean(bce)


if __name__ == "__main__":
    key = jax.random.PRNGKey(0)
    k1, k2, k3, k4, k5, k6 = jax.random.split(key, 6)

    bce_plain = BinaryCrossEntropy()
    bce_weighted = BinaryCrossEntropy(class_weights=(0.3, 0.7))

    # ---- case 1: (2,4,16,16) -> zero-copy path, 2 tiles, no masking ----
    x1 = jax.random.uniform(k1, (2, 4, 16, 16), jnp.float32, 0.02, 0.98)
    t1 = (jax.random.uniform(k2, (2, 4, 16, 16)) > 0.5).astype(jnp.float32)

    out = bce_plain(x1, t1)
    jax.block_until_ready(out)
    assert jnp.allclose(out, _ref_unweighted(x1, t1), rtol=1e-5, atol=1e-6), (
        out, _ref_unweighted(x1, t1))

    out = bce_weighted(x1, t1)
    jax.block_until_ready(out)
    assert jnp.allclose(out, _ref_weighted(x1, t1, (0.3, 0.7)),
                        rtol=1e-5, atol=1e-6)

    # opt-in single-log (hard-label) path, unweighted and weighted
    out = pallas_binary_cross_entropy(x1, t1, hard_labels=True)
    jax.block_until_ready(out)
    assert jnp.allclose(out, _ref_unweighted(x1, t1), rtol=1e-5, atol=1e-6)

    out = pallas_binary_cross_entropy(x1, t1, class_weights=(0.3, 0.7),
                                      hard_labels=True)
    jax.block_until_ready(out)
    assert jnp.allclose(out, _ref_weighted(x1, t1, (0.3, 0.7)),
                        rtol=1e-5, atol=1e-6)

    # ---- case 2: larger input -> multi-tile zero-copy grid ----
    x2 = jax.random.uniform(k3, (8, 4, 64, 64), jnp.float32, 0.01, 0.99)
    t2 = (jax.random.uniform(k4, (8, 4, 64, 64)) > 0.5).astype(jnp.float32)

    out = bce_plain(x2, t2)
    jax.block_until_ready(out)
    assert jnp.allclose(out, _ref_unweighted(x2, t2), rtol=1e-5, atol=1e-6)

    out = bce_weighted(x2, t2)
    jax.block_until_ready(out)
    assert jnp.allclose(out, _ref_weighted(x2, t2, (0.3, 0.7)),
                        rtol=1e-5, atol=1e-6)

    # ---- case 3: non-multiple-of-128 length + saturated probabilities ----
    x3 = jax.random.uniform(k5, (3, 257), jnp.float32, 0.05, 0.95)
    x3 = x3.at[0, 0].set(0.0).at[1, 5].set(1.0)          # exercise -100 clamp
    t3 = (jax.random.uniform(k6, (3, 257)) > 0.5).astype(jnp.float32)

    out = bce_plain(x3, t3)
    jax.block_until_ready(out)
    assert jnp.allclose(out, _ref_unweighted(x3, t3), rtol=1e-5, atol=1e-5)

    out = bce_weighted(x3, t3)
    jax.block_until_ready(out)
    assert jnp.allclose(out, _ref_weighted(x3, t3, (0.3, 0.7)),
                        rtol=1e-5, atol=1e-5)

    # ---- case 4: bf16 predictions, f32 targets (mixed-dtype streaming) ----
    x4 = x1.astype(jnp.bfloat16)
    out = bce_plain(x4, t1)
    jax.block_until_ready(out)
    assert jnp.allclose(out, _ref_unweighted(x4, t1), rtol=1e-4, atol=1e-5)

    print("KERNEL_OK")
</pallas_src>

<mosaic_0001>
module attributes {stable_mosaic.version = 11 : i64} {
  func.func @_bce_kernel(%arg0: i32, %arg1: memref<8x128xf32, #tpu.memory_space<vmem>>, %arg2: memref<8x128xf32, #tpu.memory_space<vmem>>, %arg3: memref<1x8x128xf32, #tpu.memory_space<vmem>>) attributes {dimension_semantics = [#tpu.dimension_semantics<parallel>], iteration_bounds = array<i64: 2>, scalar_prefetch = 0 : i64, scratch_operands = 0 : i64, tpu.core_type = #tpu.core_type<tc>, window_params = [{transform_indices = @transform_0, window_bounds = array<i64: 8, 128>}, {transform_indices = @transform_1, window_bounds = array<i64: 8, 128>}, {transform_indices = @transform_2, window_bounds = array<i64: 1, 8, 128>}]} {
    %c0 = arith.constant 0 : index
    %c0_0 = arith.constant 0 : index
    %0 = vector.load %arg1[%c0, %c0_0] : memref<8x128xf32, #tpu.memory_space<vmem>>, vector<8x128xf32>
    %c0_1 = arith.constant 0 : index
    %c0_2 = arith.constant 0 : index
    %1 = vector.load %arg2[%c0_1, %c0_2] : memref<8x128xf32, #tpu.memory_space<vmem>>, vector<8x128xf32>
    %2 = math.log %0 : vector<8x128xf32>
    %cst = arith.constant -1.000000e+02 : f32
    %3 = vector.broadcast %cst : f32 to vector<8x128xf32>
    %4 = arith.maximumf %2, %3 : vector<8x128xf32>
    %cst_3 = arith.constant 1.000000e+00 : f32
    %5 = vector.broadcast %cst_3 : f32 to vector<8x128xf32>
    %6 = arith.subf %5, %0 : vector<8x128xf32>
    %7 = math.log %6 : vector<8x128xf32>
    %cst_4 = arith.constant -1.000000e+02 : f32
    %8 = vector.broadcast %cst_4 : f32 to vector<8x128xf32>
    %9 = arith.maximumf %7, %8 : vector<8x128xf32>
    %10 = arith.mulf %1, %4 : vector<8x128xf32>
    %cst_5 = arith.constant 1.000000e+00 : f32
    %11 = vector.broadcast %cst_5 : f32 to vector<8x128xf32>
    %12 = arith.subf %11, %1 : vector<8x128xf32>
    %13 = arith.mulf %12, %9 : vector<8x128xf32>
    %14 = arith.addf %10, %13 : vector<8x128xf32>
    %cst_6 = arith.constant 0.000000e+00 : f32
    %15 = vector.broadcast %cst_6 : f32 to vector<8x128xf32>
    %16 = arith.subf %15, %14 : vector<8x128xf32>
    %17 = vector.shape_cast %16 : vector<8x128xf32> to vector<1x8x128xf32>
    %cst_7 = arith.constant dense<0.000000e+00> : vector<8x128xf32>
    %18 = vector.multi_reduction <add>, %17, %cst_7 [0] : vector<1x8x128xf32> to vector<8x128xf32>
    %c0_8 = arith.constant 0 : index
    %c0_9 = arith.constant 0 : index
    %c0_10 = arith.constant 0 : index
    %19 = vector.load %arg3[%c0_8, %c0_9, %c0_10] : memref<1x8x128xf32, #tpu.memory_space<vmem>>, vector<1x8x128xf32>
    %20 = vector.shape_cast %19 : vector<1x8x128xf32> to vector<8x128xf32>
    %21 = vector.shape_cast %18 : vector<8x128xf32> to vector<1x8x128xf32>
    tpu.vector_store %arg3[%c0_8, %c0_9, %c0_10], %21 {strides = array<i32>} : memref<1x8x128xf32, #tpu.memory_space<vmem>>, vector<1x8x128xf32>,
    return
  }
  func.func @transform_0(%arg0: i32) -> (i32, i32) {
    %c0_i32 = arith.constant 0 : i32
    %c0_i32_0 = arith.constant 0 : i32
    return %arg0, %c0_i32 : i32, i32
  }
  func.func @transform_1(%arg0: i32) -> (i32, i32) {
    %c0_i32 = arith.constant 0 : i32
    %c0_i32_0 = arith.constant 0 : i32
    return %arg0, %c0_i32 : i32, i32
  }
  func.func @transform_2(%arg0: i32) -> (i32, i32, i32) {
    %c0_i32 = arith.constant 0 : i32
    %c0_i32_0 = arith.constant 0 : i32
    %c0_i32_1 = arith.constant 0 : i32
    return %arg0, %c0_i32, %c0_i32_0 : i32, i32, i32
  }
}

</mosaic_0001>

<llo_original>
// kernel: pallas_binary_cross_entropy.1
$region0: #{pallas_binary_cross_entropy.1}
  #allocation0 [shape = 'u32[]', space=smem, size = 0x4, offset = 0x4, fixed_abs, tag = 'smem constant byte address 0x4 - core index']
  #allocation1 [shape = 'u32[72,128]{1,0:T(1,128)}', space=vmem, size = 0x9000, scoped, tag = 'internal scratch']
  %s0 = inlined_call_operand.vmem [shape: f32[16,128], index: 0, kind: input, shape index: {}]
  %s1 = inlined_call_operand.vmem [shape: f32[16,128], index: 1, kind: input, shape index: {}]
  %s2 = inlined_call_operand.vmem [shape: f32[2,8,128], index: 2, kind: output, shape index: {}]
  %s3 = sld [smem:[#allocation0]]
  $region41: #{pallas_binary_cross_entropy.1} parent=0
    _
  %s5 = ssub.s32 1, %s3
  %s6 = scalar_select 0, %s5, %s3
  loop: start=0, step=1, limit=4
  $region2: #{pallas_binary_cross_entropy.1} parent=0 // loop_pre_header
    _
  $region3: #{pallas_binary_cross_entropy.1} parent=0 // loop_header
    %s8 = sphi 0, %s12
    %p9 = scmp.ge.s32.totalorder %s8, 4
    %s18 = sphi 0, %s20
    %s21 = sphi 0, %s18
    %s22 = sphi 0, %s21
    %s38 = sphi 0, %s22
    %s44 = sphi 0, %s46
    %s47 = sphi 0, %s44
    %s48 = sphi 0, %s47
    %s64 = sphi 0, %s48
    %s70 = sphi 0, %s72
    %s73 = sphi 0, %s70
    %s74 = sphi 0, %s73
    %s90 = sphi 0, %s74
  $region4: #{pallas_binary_cross_entropy.1} parent=0 // loop_header_branch
    %11 = sbr.rel (%p9) target = $region8
  $region5: #{pallas_binary_cross_entropy.1} parent=0 // loop_body
    %s13 = ssub.s32 %s8, 1
    %s14 = ssub.s32 %s8, 2
    %s15 = sadd.s32 %s8, 1
    %s16 = ssub.s32 %s8, %s15
    %p17 = scmp.eq.s32.totalorder %s16, 0
    %s19 = sadd.s32 %s18, 1
    %s20 = scalar_select %p17, %s18, %s19
    %p23 = pneg %p17
    %p24 = scmp.eq.s32.totalorder %s8, 1
    %p25 = por %p23, %p24
    %p26 = scmp.ne.s32.totalorder %s18, %s21
    %p27 = scmp.eq.s32.totalorder %s8, 0
    %p28 = por %p26, %p27
    %p29 = scmp.ne.s32.totalorder %s18, %s21
    %p30 = scmp.eq.s32.totalorder %s13, 1
    %p31 = por %p29, %p30
    %p32 = scmp.ne.s32.totalorder %s21, %s22
    %p33 = scmp.eq.s32.totalorder %s13, 0
    %p34 = por %p32, %p33
    %p35 = scmp.ne.s32.totalorder %s21, %s22
    %p36 = scmp.eq.s32.totalorder %s14, 1
    %p37 = por %p35, %p36
    %p39 = scmp.ne.s32.totalorder %s22, %s38
    %p40 = scmp.eq.s32.totalorder %s14, 0
    %p41 = por %p39, %p40
    %s42 = ssub.s32 %s8, %s15
    %p43 = scmp.eq.s32.totalorder %s42, 0
    %s45 = sadd.s32 %s44, 1
    %s46 = scalar_select %p43, %s44, %s45
    %p49 = pneg %p43
    %p50 = scmp.eq.s32.totalorder %s8, 1
    %p51 = por %p49, %p50
    %p52 = scmp.ne.s32.totalorder %s44, %s47
    %p53 = scmp.eq.s32.totalorder %s8, 0
    %p54 = por %p52, %p53
    %p55 = scmp.ne.s32.totalorder %s44, %s47
    %p56 = scmp.eq.s32.totalorder %s13, 1
    %p57 = por %p55, %p56
    %p58 = scmp.ne.s32.totalorder %s47, %s48
    %p59 = scmp.eq.s32.totalorder %s13, 0
    %p60 = por %p58, %p59
    %p61 = scmp.ne.s32.totalorder %s47, %s48
    %p62 = scmp.eq.s32.totalorder %s14, 1
    %p63 = por %p61, %p62
    %p65 = scmp.ne.s32.totalorder %s48, %s64
    %p66 = scmp.eq.s32.totalorder %s14, 0
    %p67 = por %p65, %p66
    %s68 = ssub.s32 %s8, %s15
    %p69 = scmp.eq.s32.totalorder %s68, 0
    %s71 = sadd.s32 %s70, 1
    %s72 = scalar_select %p69, %s70, %s71
    %p75 = pneg %p69
    %p76 = scmp.eq.s32.totalorder %s8, 1
    %p77 = por %p75, %p76
    %p78 = scmp.ne.s32.totalorder %s70, %s73
    %p79 = scmp.eq.s32.totalorder %s8, 0
    %p80 = por %p78, %p79
    %p81 = scmp.ne.s32.totalorder %s70, %s73
    %p82 = scmp.eq.s32.totalorder %s13, 1
    %p83 = por %p81, %p82
    %p84 = scmp.ne.s32.totalorder %s73, %s74
    %p85 = scmp.eq.s32.totalorder %s13, 0
    %p86 = por %p84, %p85
    %p87 = scmp.ne.s32.totalorder %s73, %s74
    %p88 = scmp.eq.s32.totalorder %s14, 1
    %p89 = por %p87, %p88
    %p91 = scmp.ne.s32.totalorder %s74, %s90
    %p92 = scmp.eq.s32.totalorder %s14, 0
    %p93 = por %p91, %p92
    %p94 = scmp.le.s32.totalorder 1, %s8
    %p95 = scmp.lt.s32.totalorder %s8, 3
    %p96 = pnand %p94, %p95
    %p97 = pneg %p96
    // Predicated region
    $region9: #{pallas_binary_cross_entropy.1} parent=5 // pred_check
      _
    $region10: #{pallas_binary_cross_entropy.1} parent=5 // pred_check_branch
      %99 = sbr.rel (%p96) target = $region12
    $region11: #{pallas_binary_cross_entropy.1} parent=5 // pred_region
      %s100 = ssub.s32 %s8, 1
    $region12: #{pallas_binary_cross_entropy.1} parent=5 // pred_fallthru
      _
    %p101 = scmp.lt.s32.totalorder %s8, 2
    // Predicated region
    $region13: #{pallas_binary_cross_entropy.1} parent=5 // pred_check
      %p102 = pneg %p101
    $region14: #{pallas_binary_cross_entropy.1} parent=5 // pred_check_branch
      %104 = sbr.rel (%p102) target = $region16
    $region15: #{pallas_binary_cross_entropy.1} parent=5 // pred_region
      // Predicated region
      $region17: #{pallas_binary_cross_entropy.1} parent=15 // pred_check
        %p105 = pneg %p28
      $region18: #{pallas_binary_cross_entropy.1} parent=15 // pred_check_branch
        %107 = sbr.rel (%p105) target = $region20
      $region19: #{pallas_binary_cross_entropy.1} parent=15 // pred_region
        %p108 = scmp.lt.s32.totalorder %s8, 1
        %s109 = scalar_select %p108, %s8, 1
        %s110 = smul.addr %s109, 8
        %s111 = scalar_lea.vmem %s0, %s110
      $region20: #{pallas_binary_cross_entropy.1} parent=15 // pred_fallthru
        _
      // Predicated region
      $region21: #{pallas_binary_cross_entropy.1} parent=15 // pred_check
        %p112 = pneg %p54
      $region22: #{pallas_binary_cross_entropy.1} parent=15 // pred_check_branch
        %114 = sbr.rel (%p112) target = $region24
      $region23: #{pallas_binary_cross_entropy.1} parent=15 // pred_region
        %p115 = scmp.lt.s32.totalorder %s8, 1
        %s116 = scalar_select %p115, %s8, 1
        %s117 = smul.addr %s116, 8
        %s118 = scalar_lea.vmem %s1, %s117
      $region24: #{pallas_binary_cross_entropy.1} parent=15 // pred_fallthru
        _
    $region16: #{pallas_binary_cross_entropy.1} parent=5 // pred_fallthru
      _
    %p119 = scmp.le.s32.totalorder 1, %s8
    %p120 = scmp.lt.s32.totalorder %s8, 3
    %p121 = pnand %p119, %p120
    %p122 = pneg %p121
    // Predicated region
    $region25: #{pallas_binary_cross_entropy.1} parent=5 // pred_check
      _
    $region26: #{pallas_binary_cross_entropy.1} parent=5 // pred_check_branch
      %124 = sbr.rel (%p121) target = $region28
    $region27: #{pallas_binary_cross_entropy.1} parent=5 // pred_region
      %s125 = ssub.s32 %s8, 1
      %p126 = scmp.lt.s32.totalorder %s13, 1
      %s127 = scalar_select %p126, %s13, 1
      %s128 = smul.addr %s127, 8
      %s129 = scalar_lea.vmem %s0, %s128
      %p130 = pneg %p34
      %p131 = pneg %p31
      %p132 = scmp.lt.s32.totalorder %s13, 1
      %s133 = scalar_select %p132, %s13, 1
      %s134 = smul.addr %s133, 8
      %s135 = scalar_lea.vmem %s1, %s134
      %p136 = pneg %p60
      %p137 = pneg %p57
      %p138 = pneg %p86
      %p139 = pneg %p83
      %p140 = scmp.lt.s32.totalorder %s13, 1
      %s141 = scalar_select %p140, %s13, 1
      %s142 = smul.addr %s141, 8
      %s143 = scalar_lea.vmem %s2, %s142
      %p144 = scmp.lt.s32.totalorder %s13, 1
      %s145 = scalar_select %p144, %s13, 1
      %s146 = smul.addr %s145, 8
      %s147 = scalar_lea.vmem %s0, %s146
      %p148 = scmp.lt.s32.totalorder %s13, 1
      %s149 = scalar_select %p148, %s13, 1
      %s150 = smul.addr %s149, 8
      %s151 = scalar_lea.vmem %s1, %s150
      %p152 = scmp.lt.s32.totalorder %s13, 1
      %s153 = scalar_select %p152, %s13, 1
      %s154 = smul.addr %s153, 8
      %s155 = scalar_lea.vmem %s2, %s154
      %v156 = vld [vmem:[%s147] sm:$0xff]
      %v157 = vld [vmem:[%s151] sm:$0xff]
      %v158 = vlog2.pop %v156
      %v159 = vmul.f32 %v158, 0.6931472
      %v160 = vmax.f32 %v159, -100.0
      %v161 = vsub.f32 1.0, %v156
      %v162 = vlog2.pop %v161
      %v163 = vmul.f32 %v162, 0.6931472
      %v164 = vmax.f32 %v163, -100.0
      %v165 = vmul.f32 %v157, %v160
      %v166 = vsub.f32 1.0, %v157
      %v167 = vmul.f32 %v166, %v164
      %v168 = vadd.f32 %v165, %v167
      %v169 = vsub.f32 0.0, %v168
      %v170 = vadd.f32 %v169, 0.0
      %171 = vst [vmem:[%s155] sm:$0xff] %v170
      %p172 = scmp.lt.s32.totalorder %s13, 1
      %s173 = scalar_select %p172, %s13, 1
      %s174 = smul.addr %s173, 8
      %s175 = scalar_lea.vmem %s2, %s174
      // Predicated region
      $region29: #{pallas_binary_cross_entropy.1} parent=27 // pred_check
        %p176 = pneg %p83
      $region30: #{pallas_binary_cross_entropy.1} parent=27 // pred_check_branch
        %178 = sbr.rel (%p176) target = $region32
      $region31: #{pallas_binary_cross_entropy.1} parent=27 // pred_region
        _
      $region32: #{pallas_binary_cross_entropy.1} parent=27 // pred_fallthru
        _
    $region28: #{pallas_binary_cross_entropy.1} parent=5 // pred_fallthru
      _
    %p179 = scmp.le.s32.totalorder 2, %s8
    // Predicated region
    $region33: #{pallas_binary_cross_entropy.1} parent=5 // pred_check
      %p180 = pneg %p179
    $region34: #{pallas_binary_cross_entropy.1} parent=5 // pred_check_branch
      %182 = sbr.rel (%p180) target = $region36
    $region35: #{pallas_binary_cross_entropy.1} parent=5 // pred_region
      %s183 = ssub.s32 %s8, 2
      // Predicated region
      $region37: #{pallas_binary_cross_entropy.1} parent=35 // pred_check
        %p184 = pneg %p89
      $region38: #{pallas_binary_cross_entropy.1} parent=35 // pred_check_branch
        %186 = sbr.rel (%p184) target = $region40
      $region39: #{pallas_binary_cross_entropy.1} parent=35 // pred_region
        %p187 = scmp.lt.s32.totalorder %s14, 1
        %s188 = scalar_select %p187, %s14, 1
        %s189 = smul.addr %s188, 8
        %s190 = scalar_lea.vmem %s2, %s189
      $region40: #{pallas_binary_cross_entropy.1} parent=35 // pred_fallthru
        _
    $region36: #{pallas_binary_cross_entropy.1} parent=5 // pred_fallthru
      _
  $region6: #{pallas_binary_cross_entropy.1} parent=0 // loop_footer
    %s12 = sadd.s32 1, %s8
  $region7: #{pallas_binary_cross_entropy.1} parent=0 // loop_footer_branch
    %7 = sbr.rel target = $region3
  $region8: #{pallas_binary_cross_entropy.1} parent=0 // loop_exit
    _

</llo_original>
